<compile_context>
chip_gen: v5e
topology: v5e:2x2
jax: 0.10.0
libtpu: 0.0.40
codegen_flags: <defaults>
</compile_context>

<pallas_src>
import functools

import jax
import jax.numpy as jnp
from jax import lax
from jax.experimental import pallas as pl
from jax.experimental.pallas import tpu as pltpu

_PACK = 8  # batch rows packed into the lane dimension per MXU row


def _round_up(n, m):
    return ((n + m - 1) // m) * m


def _cdiv(a, b):
    return (a + b - 1) // b


def _mdn_kernel(x_ref, w1_ref, b1_ref, wh_ref, bh_ref, out_ref, *,
                n_gaussians, head_group):
    """One batch tile of packed rows.

    x_ref   : [tbp, PACK*n_input]   (8 batch rows per packed row)
    w1_ref  : [PACK*n_input, PACK*n_hidden]   block-diagonal
    wh_ref  : [PACK*n_hidden, PACK*head_group] block-diagonal fused heads
    out_ref : [tbp, PACK*head_group]  per-group layout: pi|mu|sigma|pad
    """
    g = n_gaussians

    # ---- layer 1: packed block-diagonal MXU dot + lane-dense tanh ----
    hidden = jnp.tanh(
        jnp.dot(x_ref[...], w1_ref[...], preferred_element_type=jnp.float32)
        + b1_ref[...])

    # ---- fused pi/mu/sigma heads: one packed MXU dot ----
    heads = (jnp.dot(hidden, wh_ref[...], preferred_element_type=jnp.float32)
             + bh_ref[...])

    lw = heads.shape[-1]
    lane = lax.broadcasted_iota(jnp.int32, heads.shape, 1)
    pos = lane % head_group                    # position inside a head group
    pi_mask = pos < g
    sig_mask = (pos >= 2 * g) & (pos < 3 * g)

    # ---- segmented softmax over the g pi lanes of every head group ----
    # Per-group max: symmetric roll butterfly (idempotent -> direction-proof).
    neg_big = jnp.float32(-1e30)
    m = jnp.where(pi_mask, heads, neg_big)
    s = 1
    while s < g:
        m = jnp.maximum(m, jnp.maximum(pltpu.roll(m, shift=s, axis=1),
                                       pltpu.roll(m, shift=lw - s, axis=1)))
        s *= 2
    gmax = jnp.where(pi_mask, m, jnp.float32(0.0))

    # One EUP exp serves both softmax (pi lanes, max-shifted) and sigma lanes.
    ex = jnp.exp(heads - gmax)
    e = jnp.where(pi_mask, ex, jnp.float32(0.0))

    # Per-group sum: two one-directional butterflies + inclusion/exclusion
    # (direction-agnostic; pads are exact zeros so groups never contaminate).
    fwd = e
    bwd = e
    s = 1
    while s < g:
        fwd = fwd + pltpu.roll(fwd, shift=s, axis=1)
        bwd = bwd + pltpu.roll(bwd, shift=lw - s, axis=1)
        s *= 2
    gsum = fwd + bwd - e

    # Exact reciprocal keeps sum(pi) == 1 within 1e-5.
    inv = pl.reciprocal(jnp.where(pi_mask, gsum, jnp.float32(1.0)), approx=False)

    # Single full-width (unmasked) store of the fused slab.
    out_ref[...] = jnp.where(pi_mask, e * inv, jnp.where(sig_mask, ex, heads))


def mdn_forward(x, params, *, batch_tile=8192, core_parallel=False):
    """x: [B, n_input] float32.  params: dict of (in,out)-layout weights.

    Returns (pi, mu, sigma), each [B, n_gaussians] float32.
    """
    B, n_input = x.shape
    n_hidden = params["w1"].shape[1]
    g = params["w_pi"].shape[1]
    P = _PACK
    # Per-row head slot; multiple of 128//P so the packed output is 128-lane
    # aligned (G=4 -> 16 lanes: pi[4]|mu[4]|sigma[4]|pad[4]).
    hg = _round_up(3 * g, 128 // P)
    dtype = jnp.float32

    # ---- block-diagonal packed weights (built once per call, XLA-side) ----
    eye = jnp.eye(P, dtype=dtype)
    w1_blk = jnp.kron(eye, params["w1"].astype(dtype))          # [P*ni, P*nh]
    b1_blk = jnp.tile(params["b1"].astype(dtype), (1, P))       # [1, P*nh]

    pad_cols = hg - 3 * g
    wh = jnp.concatenate(
        [params["w_pi"], params["w_mu"], params["w_sigma"],
         jnp.zeros((n_hidden, pad_cols), dtype)], axis=1).astype(dtype)
    bh = jnp.concatenate(
        [params["b_pi"], params["b_mu"], params["b_sigma"],
         jnp.zeros((1, pad_cols), dtype)], axis=1).astype(dtype)
    wh_blk = jnp.kron(eye, wh)                                  # [P*nh, P*hg]
    bh_blk = jnp.tile(bh, (1, P))                               # [1, P*hg]

    # ---- batch tiling in packed rows (P original rows per packed row) ----
    bp = _cdiv(B, P)
    if bp < 16:
        tbp = bp                                   # single tile == full extent
    else:
        # Even out tiles (padding waste < one tile), keep the sublane multiple
        # of 8, and cap so there are >= 2 grid steps (TensorCore sharding).
        tgt = max(8, min(max(1, batch_tile // P),
                         _round_up(_cdiv(bp, 2), 8)))
        tbp = _round_up(_cdiv(bp, _cdiv(bp, tgt)), 8)
    bp_pad = _round_up(bp, tbp)
    b_pad = bp_pad * P

    x = x.astype(dtype)
    if b_pad != B:
        x = jnp.pad(x, ((0, b_pad - B), (0, 0)))   # pad rows are finite & dropped
    x_packed = x.reshape(bp_pad, P * n_input)      # pure contiguous reshape

    grid = (bp_pad // tbp,)
    out_shape = jax.ShapeDtypeStruct((bp_pad, P * hg), dtype)

    cost = pl.CostEstimate(
        flops=2 * bp_pad * ((P * n_input) * (P * n_hidden)
                            + (P * n_hidden) * (P * hg)),
        transcendentals=bp_pad * (P * n_hidden + 2 * P * hg),
        bytes_accessed=4 * (bp_pad * P * (n_input + hg)
                            + int(w1_blk.size) + int(wh_blk.size)
                            + int(b1_blk.size) + int(bh_blk.size)),
    )

    kernel = functools.partial(_mdn_kernel, n_gaussians=g, head_group=hg)
    sem = pltpu.CORE_PARALLEL if core_parallel else "parallel"

    fused = pl.pallas_call(
        kernel,
        out_shape=out_shape,
        grid=grid,
        in_specs=[
            # Batch-tiled packed activations (double-buffered by Pallas).
            pl.BlockSpec((tbp, P * n_input), lambda i: (i, 0)),
            # Weights / biases: constant block index -> VMEM-resident.
            pl.BlockSpec((P * n_input, P * n_hidden), lambda i: (0, 0)),
            pl.BlockSpec((1, P * n_hidden), lambda i: (0, 0)),
            pl.BlockSpec((P * n_hidden, P * hg), lambda i: (0, 0)),
            pl.BlockSpec((1, P * hg), lambda i: (0, 0)),
        ],
        out_specs=pl.BlockSpec((tbp, P * hg), lambda i: (i, 0)),
        compiler_params=pltpu.CompilerParams(
            dimension_semantics=(sem,),
            # Packed blocks are lane-dense, so VMEM use is ~MBs even at
            # tbp=1024; 32 MiB is safe on v5e/v6e/v7x alike.
            vmem_limit_bytes=32 * 1024 * 1024,
        ),
        cost_estimate=cost,
    )(x_packed, w1_blk, b1_blk, wh_blk, bh_blk)

    # Un-pack: [bp_pad, P*hg] -> [bp_pad*P, hg] (contiguous), drop pad rows.
    flat = fused.reshape(bp_pad * P, hg)[:B]
    pi = flat[:, :g]
    mu = flat[:, g:2 * g]
    sigma = flat[:, 2 * g:3 * g]
    return pi, mu, sigma


def init_params(key, n_input, n_hidden, n_gaussians):
    """PyTorch-style uniform(-1/sqrt(fan_in), 1/sqrt(fan_in)) init.
    Weights stored as [in_features, out_features] (transposed vs torch)."""
    def linear(key, fan_in, fan_out):
        kw, kb = jax.random.split(key)
        bound = 1.0 / (fan_in ** 0.5)
        w = jax.random.uniform(kw, (fan_in, fan_out), jnp.float32,
                               minval=-bound, maxval=bound)
        b = jax.random.uniform(kb, (1, fan_out), jnp.float32,
                               minval=-bound, maxval=bound)
        return w, b

    k1, k2, k3, k4 = jax.random.split(key, 4)
    w1, b1 = linear(k1, n_input, n_hidden)
    w_pi, b_pi = linear(k2, n_hidden, n_gaussians)
    w_mu, b_mu = linear(k3, n_hidden, n_gaussians)
    w_sigma, b_sigma = linear(k4, n_hidden, n_gaussians)
    return dict(w1=w1, b1=b1, w_pi=w_pi, b_pi=b_pi,
                w_mu=w_mu, b_mu=b_mu, w_sigma=w_sigma, b_sigma=b_sigma)


def _reference(x, p):
    hidden = jnp.tanh(x @ p["w1"] + p["b1"])
    pi = jax.nn.softmax(hidden @ p["w_pi"] + p["b_pi"], axis=1)
    mu = hidden @ p["w_mu"] + p["b_mu"]
    sigma = jnp.exp(hidden @ p["w_sigma"] + p["b_sigma"])
    return pi, mu, sigma


# TODO(synk): MDNPerceptron.sample (multinomial + normal draws) and loss_fn are
# host-side sampling / training utilities, not part of forward(); not ported.

if __name__ == "__main__":
    key = jax.random.PRNGKey(0)
    kx, kp = jax.random.split(key)

    B, n_input, n_hidden, n_gaussians = 8, 16, 32, 4
    x = jax.random.normal(kx, (B, n_input), jnp.float32)
    params = init_params(kp, n_input, n_hidden, n_gaussians)

    pi, mu, sigma = jax.block_until_ready(mdn_forward(x, params))

    # sanity check against pure-JAX reference
    pi_r, mu_r, sigma_r = _reference(x, params)
    assert pi.shape == (B, n_gaussians) and mu.shape == (B, n_gaussians)
    assert sigma.shape == (B, n_gaussians)
    assert jnp.allclose(pi, pi_r, atol=1e-5), "pi mismatch"
    assert jnp.allclose(mu, mu_r, atol=1e-5), "mu mismatch"
    assert jnp.allclose(sigma, sigma_r, atol=1e-5), "sigma mismatch"
    assert jnp.allclose(jnp.sum(pi, axis=1), 1.0, atol=1e-5), "pi not normalized"

    print("KERNEL_OK")
</pallas_src>

<mosaic_0001>
module attributes {stable_mosaic.version = 11 : i64} {
  func.func @_mdn_kernel(%arg0: i32, %arg1: memref<1x128xf32, #tpu.memory_space<vmem>>, %arg2: memref<128x256xf32, #tpu.memory_space<vmem>>, %arg3: memref<1x256xf32, #tpu.memory_space<vmem>>, %arg4: memref<256x128xf32, #tpu.memory_space<vmem>>, %arg5: memref<1x128xf32, #tpu.memory_space<vmem>>, %arg6: memref<1x128xf32, #tpu.memory_space<vmem>>) attributes {dimension_semantics = [#tpu.dimension_semantics<parallel>], iteration_bounds = array<i64: 1>, scalar_prefetch = 0 : i64, scratch_operands = 0 : i64, tpu.core_type = #tpu.core_type<tc>, window_params = [{transform_indices = @transform_0, window_bounds = array<i64: 1, 128>}, {pipeline_mode = #tpu.pipeline_mode<synchronous>, transform_indices = @transform_1, window_bounds = array<i64: 128, 256>}, {pipeline_mode = #tpu.pipeline_mode<synchronous>, transform_indices = @transform_2, window_bounds = array<i64: 1, 256>}, {pipeline_mode = #tpu.pipeline_mode<synchronous>, transform_indices = @transform_3, window_bounds = array<i64: 256, 128>}, {pipeline_mode = #tpu.pipeline_mode<synchronous>, transform_indices = @transform_4, window_bounds = array<i64: 1, 128>}, {transform_indices = @transform_5, window_bounds = array<i64: 1, 128>}]} {
    %c0 = arith.constant 0 : index
    %c0_0 = arith.constant 0 : index
    %0 = vector.load %arg1[%c0, %c0_0] : memref<1x128xf32, #tpu.memory_space<vmem>>, vector<1x128xf32>
    %c0_1 = arith.constant 0 : index
    %c0_2 = arith.constant 0 : index
    %1 = vector.load %arg2[%c0_1, %c0_2] : memref<128x256xf32, #tpu.memory_space<vmem>>, vector<128x256xf32>
    %cst = arith.constant dense<0.000000e+00> : vector<1x256xf32>
    %2 = tpu.matmul %0, %1, %cst {dimension_numbers = #tpu.dot_dimension_numbers<[1], [0], [0], [1], [0, 0, 1, 1], [], []>} : vector<1x128xf32>, vector<128x256xf32>, vector<1x256xf32> -> vector<1x256xf32>
    %c0_3 = arith.constant 0 : index
    %c0_4 = arith.constant 0 : index
    %3 = vector.load %arg3[%c0_3, %c0_4] : memref<1x256xf32, #tpu.memory_space<vmem>>, vector<1x256xf32>
    %4 = arith.addf %2, %3 : vector<1x256xf32>
    %5 = math.tanh %4 : vector<1x256xf32>
    %c0_5 = arith.constant 0 : index
    %c0_6 = arith.constant 0 : index
    %6 = vector.load %arg4[%c0_5, %c0_6] : memref<256x128xf32, #tpu.memory_space<vmem>>, vector<256x128xf32>
    %cst_7 = arith.constant dense<0.000000e+00> : vector<1x128xf32>
    %7 = tpu.matmul %5, %6, %cst_7 {dimension_numbers = #tpu.dot_dimension_numbers<[1], [0], [0], [1], [0, 0, 1, 1], [], []>} : vector<1x256xf32>, vector<256x128xf32>, vector<1x128xf32> -> vector<1x128xf32>
    %c0_8 = arith.constant 0 : index
    %c0_9 = arith.constant 0 : index
    %8 = vector.load %arg5[%c0_8, %c0_9] : memref<1x128xf32, #tpu.memory_space<vmem>>, vector<1x128xf32>
    %9 = arith.addf %7, %8 : vector<1x128xf32>
    %10 = tpu.iota {dimensions = array<i32: 1>} : vector<1x128xi32>
    %c16_i32 = arith.constant 16 : i32
    %c0_i32 = arith.constant 0 : i32
    %11 = arith.cmpi eq, %c16_i32, %c0_i32 : i32
    %c1_i32 = arith.constant 1 : i32
    %12 = arith.select %11, %c1_i32, %c16_i32 : i32
    %13 = vector.broadcast %12 : i32 to vector<1x128xi32>
    %14 = arith.remsi %10, %13 : vector<1x128xi32>
    %c0_i32_10 = arith.constant 0 : i32
    %15 = vector.broadcast %c0_i32_10 : i32 to vector<1x128xi32>
    %16 = arith.cmpi ne, %14, %15 : vector<1x128xi32>
    %c0_i32_11 = arith.constant 0 : i32
    %17 = vector.broadcast %c0_i32_11 : i32 to vector<1x128xi32>
    %18 = arith.cmpi slt, %14, %17 : vector<1x128xi32>
    %c0_i32_12 = arith.constant 0 : i32
    %19 = arith.cmpi slt, %12, %c0_i32_12 : i32
    %20 = vector.broadcast %19 : i1 to vector<1x128xi1>
    %21 = vector.broadcast %20 : vector<1x128xi1> to vector<1x128xi1>
    %22 = arith.xori %18, %21 : vector<1x128xi1>
    %23 = arith.andi %22, %16 : vector<1x128xi1>
    %24 = vector.broadcast %12 : i32 to vector<1x128xi32>
    %25 = arith.addi %14, %24 : vector<1x128xi32>
    %26 = arith.select %23, %25, %14 : vector<1x128xi1>, vector<1x128xi32>
    %c4_i32 = arith.constant 4 : i32
    %27 = vector.broadcast %c4_i32 : i32 to vector<1x128xi32>
    %28 = arith.cmpi slt, %26, %27 : vector<1x128xi32>
    %c8_i32 = arith.constant 8 : i32
    %29 = vector.broadcast %c8_i32 : i32 to vector<1x128xi32>
    %30 = arith.cmpi sge, %26, %29 : vector<1x128xi32>
    %c12_i32 = arith.constant 12 : i32
    %31 = vector.broadcast %c12_i32 : i32 to vector<1x128xi32>
    %32 = arith.cmpi slt, %26, %31 : vector<1x128xi32>
    %33 = arith.andi %30, %32 : vector<1x128xi1>
    %cst_13 = arith.constant -1.000000e+30 : f32
    %34 = vector.broadcast %cst_13 : f32 to vector<1x128xf32>
    %35 = arith.select %28, %9, %34 : vector<1x128xi1>, vector<1x128xf32>
    %c1_i32_14 = arith.constant 1 : i32
    %36 = tpu.dynamic_rotate %35 by %c1_i32_14 dim 1 : vector<1x128xf32>, i32 -> vector<1x128xf32>
    %c127_i32 = arith.constant 127 : i32
    %37 = tpu.dynamic_rotate %35 by %c127_i32 dim 1 : vector<1x128xf32>, i32 -> vector<1x128xf32>
    %38 = arith.maximumf %36, %37 : vector<1x128xf32>
    %39 = arith.maximumf %35, %38 : vector<1x128xf32>
    %c2_i32 = arith.constant 2 : i32
    %40 = tpu.dynamic_rotate %39 by %c2_i32 dim 1 : vector<1x128xf32>, i32 -> vector<1x128xf32>
    %c126_i32 = arith.constant 126 : i32
    %41 = tpu.dynamic_rotate %39 by %c126_i32 dim 1 : vector<1x128xf32>, i32 -> vector<1x128xf32>
    %42 = arith.maximumf %40, %41 : vector<1x128xf32>
    %43 = arith.maximumf %39, %42 : vector<1x128xf32>
    %cst_15 = arith.constant 0.000000e+00 : f32
    %44 = vector.broadcast %cst_15 : f32 to vector<1x128xf32>
    %45 = arith.select %28, %43, %44 : vector<1x128xi1>, vector<1x128xf32>
    %46 = arith.subf %9, %45 : vector<1x128xf32>
    %47 = math.exp %46 : vector<1x128xf32>
    %cst_16 = arith.constant 0.000000e+00 : f32
    %48 = vector.broadcast %cst_16 : f32 to vector<1x128xf32>
    %49 = arith.select %28, %47, %48 : vector<1x128xi1>, vector<1x128xf32>
    %c1_i32_17 = arith.constant 1 : i32
    %50 = tpu.dynamic_rotate %49 by %c1_i32_17 dim 1 : vector<1x128xf32>, i32 -> vector<1x128xf32>
    %51 = arith.addf %49, %50 : vector<1x128xf32>
    %c127_i32_18 = arith.constant 127 : i32
    %52 = tpu.dynamic_rotate %49 by %c127_i32_18 dim 1 : vector<1x128xf32>, i32 -> vector<1x128xf32>
    %53 = arith.addf %49, %52 : vector<1x128xf32>
    %c2_i32_19 = arith.constant 2 : i32
    %54 = tpu.dynamic_rotate %51 by %c2_i32_19 dim 1 : vector<1x128xf32>, i32 -> vector<1x128xf32>
    %55 = arith.addf %51, %54 : vector<1x128xf32>
    %c126_i32_20 = arith.constant 126 : i32
    %56 = tpu.dynamic_rotate %53 by %c126_i32_20 dim 1 : vector<1x128xf32>, i32 -> vector<1x128xf32>
    %57 = arith.addf %53, %56 : vector<1x128xf32>
    %58 = arith.addf %55, %57 : vector<1x128xf32>
    %59 = arith.subf %58, %49 : vector<1x128xf32>
    %cst_21 = arith.constant 1.000000e+00 : f32
    %60 = vector.broadcast %cst_21 : f32 to vector<1x128xf32>
    %61 = arith.select %28, %59, %60 : vector<1x128xi1>, vector<1x128xf32>
    %62 = tpu.reciprocal %61 : vector<1x128xf32> -> vector<1x128xf32>
    %63 = arith.mulf %49, %62 : vector<1x128xf32>
    %64 = arith.select %33, %47, %9 : vector<1x128xi1>, vector<1x128xf32>
    %65 = arith.select %28, %63, %64 : vector<1x128xi1>, vector<1x128xf32>
    %c0_22 = arith.constant 0 : index
    %c0_23 = arith.constant 0 : index
    %66 = vector.load %arg6[%c0_22, %c0_23] : memref<1x128xf32, #tpu.memory_space<vmem>>, vector<1x128xf32>
    tpu.vector_store %arg6[%c0_22, %c0_23], %65 {strides = array<i32>} : memref<1x128xf32, #tpu.memory_space<vmem>>, vector<1x128xf32>,
    return
  }
  func.func @transform_0(%arg0: i32) -> (i32, i32) {
    %c0_i32 = arith.constant 0 : i32
    %c0_i32_0 = arith.constant 0 : i32
    return %arg0, %c0_i32 : i32, i32
  }
  func.func @transform_1(%arg0: i32) -> (i32, i32) {
    %c0_i32 = arith.constant 0 : i32
    %c0_i32_0 = arith.constant 0 : i32
    %c0_i32_1 = arith.constant 0 : i32
    return %c0_i32, %c0_i32_0 : i32, i32
  }
  func.func @transform_2(%arg0: i32) -> (i32, i32) {
    %c0_i32 = arith.constant 0 : i32
    %c0_i32_0 = arith.constant 0 : i32
    %c0_i32_1 = arith.constant 0 : i32
    return %c0_i32, %c0_i32_0 : i32, i32
  }
  func.func @transform_3(%arg0: i32) -> (i32, i32) {
    %c0_i32 = arith.constant 0 : i32
    %c0_i32_0 = arith.constant 0 : i32
    %c0_i32_1 = arith.constant 0 : i32
    return %c0_i32, %c0_i32_0 : i32, i32
  }
  func.func @transform_4(%arg0: i32) -> (i32, i32) {
    %c0_i32 = arith.constant 0 : i32
    %c0_i32_0 = arith.constant 0 : i32
    %c0_i32_1 = arith.constant 0 : i32
    return %c0_i32, %c0_i32_0 : i32, i32
  }
  func.func @transform_5(%arg0: i32) -> (i32, i32) {
    %c0_i32 = arith.constant 0 : i32
    %c0_i32_0 = arith.constant 0 : i32
    return %arg0, %c0_i32 : i32, i32
  }
}

</mosaic_0001>

<llo_original>
// kernel: tpu_custom_call.1
$region0: #{tpu_custom_call.1}
  #allocation0 [shape = 'u32[]', space=smem, size = 0x4, offset = 0x4, fixed_abs, tag = 'smem constant byte address 0x4 - core index']
  #allocation1 [shape = 'u32[72,128]{1,0:T(1,128)}', space=vmem, size = 0x9000, scoped, tag = 'internal scratch']
  %s0 = inlined_call_operand.hbm [shape: f32[1,128], index: 0, kind: input, shape index: {}]
  %s1 = inlined_call_operand.hbm [shape: f32[128,256], index: 1, kind: input, shape index: {}]
  %s2 = inlined_call_operand.hbm [shape: f32[1,256], index: 2, kind: input, shape index: {}]
  %s3 = inlined_call_operand.hbm [shape: f32[256,128], index: 3, kind: input, shape index: {}]
  %s4 = inlined_call_operand.vmem [shape: f32[1,128], index: 4, kind: input, shape index: {}]
  %s5 = inlined_call_operand.hbm [shape: f32[1,128], index: 5, kind: output, shape index: {}]
  %s6 = sld [smem:[#allocation0]]
  $region46: #{tpu_custom_call.1} parent=0
    _
  %s8 = ssub.s32 1, %s6
  %s9 = scalar_select 0, %s8, %s6
  $region1: #{tpu_custom_call.1} parent=0
    #allocation2 [shape = 'u8[512]{0}', space=vmem, size = 0x400, scoped, tag = 'input window, operand 0, single buffered']
    #allocation3 [shape = 's32[1]{0}', space=sflag, size = 0x4, scoped, tag = 'scoped memory for tpu_custom_call.1']
    #allocation4 [shape = 's32[1]{0}', space=sflag, size = 0x4, scoped, tag = 'scoped memory for tpu_custom_call.1']
    #allocation5 [shape = 'u8[131072]{0}', space=vmem, size = 0x20000, scoped, tag = 'input window, operand 1, single buffered']
    #allocation6 [shape = 's32[1]{0}', space=sflag, size = 0x4, scoped, tag = 'scoped memory for tpu_custom_call.1']
    #allocation7 [shape = 'u8[1024]{0}', space=vmem, size = 0x400, scoped, tag = 'input window, operand 2, single buffered']
    #allocation8 [shape = 'u8[131072]{0}', space=vmem, size = 0x20000, scoped, tag = 'input window, operand 3, single buffered']
    #allocation9 [shape = 's32[1]{0}', space=sflag, size = 0x4, scoped, tag = 'scoped memory for tpu_custom_call.1']
    #allocation10 [shape = 'u8[512]{0}', space=vmem, size = 0x400, scoped, tag = 'output window, operand 0, single buffered']
    %10 = vsyncpa [#allocation3], 0
    %11 = vsyncpa [#allocation6], 0
    %12 = vsyncpa [#allocation9], 0
    %13 = vsyncpa [#allocation4], 0
    // Predicated region
    $region2: #{tpu_custom_call.1} parent=1 // pred_check
      _
    $region3: #{tpu_custom_call.1} parent=1 // pred_check_branch
      %15 = sbr.rel (0) target = $region5
    $region4: #{tpu_custom_call.1} parent=1 // pred_region
      %17 = vsyncadd [#allocation3], 0
      %s19 = sshll.u32 %s0, 4
      %s20 = int_to_ptr.hbm [resolvable:$true] %s19
      %s21 = sshll.u32 [#allocation2], 4
      %s22 = int_to_ptr.vmem [resolvable:$true] %s21
      %24 = dma.hbm_to_vmem [thread:$0]  %s20, 16, %s22, [#allocation3]
    $region5: #{tpu_custom_call.1} parent=1 // pred_fallthru
      _
    // Predicated region
    $region6: #{tpu_custom_call.1} parent=1 // pred_check
      _
    $region7: #{tpu_custom_call.1} parent=1 // pred_check_branch
      %26 = sbr.rel (0) target = $region9
    $region8: #{tpu_custom_call.1} parent=1 // pred_region
      %28 = vsyncadd [#allocation6], 0
      %s29 = sshll.u32 %s1, 4
      %s30 = int_to_ptr.hbm [resolvable:$true] %s29
      %s31 = sshll.u32 [#allocation5], 4
      %s32 = int_to_ptr.vmem [resolvable:$true] %s31
      %37 = dma.hbm_to_vmem [thread:$0]  %s30, 4096, %s32, [#allocation6], 256, 256, 16
    $region9: #{tpu_custom_call.1} parent=1 // pred_fallthru
      _
    // Predicated region
    $region10: #{tpu_custom_call.1} parent=1 // pred_check
      _
    $region11: #{tpu_custom_call.1} parent=1 // pred_check_branch
      %39 = sbr.rel (0) target = $region13
    $region12: #{tpu_custom_call.1} parent=1 // pred_region
      %41 = vsyncadd [#allocation6], 0
      %s43 = sshll.u32 %s2, 4
      %s44 = int_to_ptr.hbm [resolvable:$true] %s43
      %s45 = sshll.u32 [#allocation7], 4
      %s46 = int_to_ptr.vmem [resolvable:$true] %s45
      %48 = dma.hbm_to_vmem [thread:$0]  %s44, 32, %s46, [#allocation6]
    $region13: #{tpu_custom_call.1} parent=1 // pred_fallthru
      _
    // Predicated region
    $region14: #{tpu_custom_call.1} parent=1 // pred_check
      _
    $region15: #{tpu_custom_call.1} parent=1 // pred_check_branch
      %50 = sbr.rel (0) target = $region17
    $region16: #{tpu_custom_call.1} parent=1 // pred_region
      %52 = vsyncadd [#allocation9], 0
      %s53 = sshll.u32 %s3, 4
      %s54 = int_to_ptr.hbm [resolvable:$true] %s53
      %s55 = sshll.u32 [#allocation8], 4
      %s56 = int_to_ptr.vmem [resolvable:$true] %s55
      %61 = dma.hbm_to_vmem [thread:$0]  %s54, 4096, %s56, [#allocation9], 128, 128, 8
    $region17: #{tpu_custom_call.1} parent=1 // pred_fallthru
      _
    // Predicated region
    $region18: #{tpu_custom_call.1} parent=1 // pred_check
      _
    $region19: #{tpu_custom_call.1} parent=1 // pred_check_branch
      %63 = sbr.rel (0) target = $region21
    $region20: #{tpu_custom_call.1} parent=1 // pred_region
      _
    $region21: #{tpu_custom_call.1} parent=1 // pred_fallthru
      _
    // Predicated region
    $region22: #{tpu_custom_call.1} parent=1 // pred_check
      _
    $region23: #{tpu_custom_call.1} parent=1 // pred_check_branch
      %65 = sbr.rel (0) target = $region25
    $region24: #{tpu_custom_call.1} parent=1 // pred_region
      %67 = dma.done [#allocation3], 16
    $region25: #{tpu_custom_call.1} parent=1 // pred_fallthru
      _
    // Predicated region
    $region26: #{tpu_custom_call.1} parent=1 // pred_check
      _
    $region27: #{tpu_custom_call.1} parent=1 // pred_check_branch
      %69 = sbr.rel (0) target = $region29
    $region28: #{tpu_custom_call.1} parent=1 // pred_region
      %71 = dma.done [#allocation6], 4096
    $region29: #{tpu_custom_call.1} parent=1 // pred_fallthru
      _
    // Predicated region
    $region30: #{tpu_custom_call.1} parent=1 // pred_check
      _
    $region31: #{tpu_custom_call.1} parent=1 // pred_check_branch
      %73 = sbr.rel (0) target = $region33
    $region32: #{tpu_custom_call.1} parent=1 // pred_region
      %75 = dma.done [#allocation6], 32
    $region33: #{tpu_custom_call.1} parent=1 // pred_fallthru
      _
    // Predicated region
    $region34: #{tpu_custom_call.1} parent=1 // pred_check
      _
    $region35: #{tpu_custom_call.1} parent=1 // pred_check_branch
      %77 = sbr.rel (0) target = $region37
    $region36: #{tpu_custom_call.1} parent=1 // pred_region
      %79 = dma.done [#allocation9], 4096
    $region37: #{tpu_custom_call.1} parent=1 // pred_fallthru
      _
    %v80 = vld [vmem:[#allocation2] sm:$0x1]
    %v81 = vld [vmem:[#allocation5] sm:$0xff]
    %v82 = vld [vmem:[#allocation5 + $0x8] sm:$0xff]
    %v83 = vld [vmem:[#allocation5 + $0x10] sm:$0xff]
    %v84 = vld [vmem:[#allocation5 + $0x18] sm:$0xff]
    %v85 = vld [vmem:[#allocation5 + $0x20] sm:$0xff]
    %v86 = vld [vmem:[#allocation5 + $0x28] sm:$0xff]
    %v87 = vld [vmem:[#allocation5 + $0x30] sm:$0xff]
    %v88 = vld [vmem:[#allocation5 + $0x38] sm:$0xff]
    %v89 = vld [vmem:[#allocation5 + $0x40] sm:$0xff]
    %v90 = vld [vmem:[#allocation5 + $0x48] sm:$0xff]
    %v91 = vld [vmem:[#allocation5 + $0x50] sm:$0xff]
    %v92 = vld [vmem:[#allocation5 + $0x58] sm:$0xff]
    %v93 = vld [vmem:[#allocation5 + $0x60] sm:$0xff]
    %v94 = vld [vmem:[#allocation5 + $0x68] sm:$0xff]
    %v95 = vld [vmem:[#allocation5 + $0x70] sm:$0xff]
    %v96 = vld [vmem:[#allocation5 + $0x78] sm:$0xff]
    %v97 = vld [vmem:[#allocation5 + $0x80] sm:$0xff]
    %v98 = vld [vmem:[#allocation5 + $0x88] sm:$0xff]
    %v99 = vld [vmem:[#allocation5 + $0x90] sm:$0xff]
    %v100 = vld [vmem:[#allocation5 + $0x98] sm:$0xff]
    %v101 = vld [vmem:[#allocation5 + $0xa0] sm:$0xff]
    %v102 = vld [vmem:[#allocation5 + $0xa8] sm:$0xff]
    %v103 = vld [vmem:[#allocation5 + $0xb0] sm:$0xff]
    %v104 = vld [vmem:[#allocation5 + $0xb8] sm:$0xff]
    %v105 = vld [vmem:[#allocation5 + $0xc0] sm:$0xff]
    %v106 = vld [vmem:[#allocation5 + $0xc8] sm:$0xff]
    %v107 = vld [vmem:[#allocation5 + $0xd0] sm:$0xff]
    %v108 = vld [vmem:[#allocation5 + $0xd8] sm:$0xff]
    %v109 = vld [vmem:[#allocation5 + $0xe0] sm:$0xff]
    %v110 = vld [vmem:[#allocation5 + $0xe8] sm:$0xff]
    %v111 = vld [vmem:[#allocation5 + $0xf0] sm:$0xff]
    %v112 = vld [vmem:[#allocation5 + $0xf8] sm:$0xff]
    %v113 = vld [vmem:[#allocation7] sm:$0x3]
    %v115 = vperm.slane %v113, 0
    %v116 = vperm.slane %v113, 1
    %119 = vmatpush.msra.mxu0 %v111
    %120 = vmatpush.msra.mxu0 %v109
    %121 = vmatpush.msra.mxu0 %v107
    %122 = vmatpush.msra.mxu0 %v105
    %123 = vmatpush.msra.mxu0 %v103
    %124 = vmatpush.msra.mxu0 %v101
    %125 = vmatpush.msra.mxu0 %v99
    %126 = vmatpush.msra.mxu0 %v97
    %127 = vmatpush.msra.mxu0 %v95
    %128 = vmatpush.msra.mxu0 %v93
    %129 = vmatpush.msra.mxu0 %v91
    %130 = vmatpush.msra.mxu0 %v89
    %131 = vmatpush.msra.mxu0 %v87
    %132 = vmatpush.msra.mxu0 %v85
    %133 = vmatpush.msra.mxu0 %v83
    %134 = vmatpush.msra.mxu0 %v81
    %135 = vmatmul.f32.gmra.mxu0 %v80
    %v136 = vpop.f32.mrf.mxu0
    %v137 = vadd.f32 %v115, %v136
    %138 = vdwg.mxu0
    %139 = vmatpush.msra.mxu0 %v112
    %140 = vmatpush.msra.mxu0 %v110
    %141 = vmatpush.msra.mxu0 %v108
    %142 = vmatpush.msra.mxu0 %v106
    %143 = vmatpush.msra.mxu0 %v104
    %144 = vmatpush.msra.mxu0 %v102
    %145 = vmatpush.msra.mxu0 %v100
    %146 = vmatpush.msra.mxu0 %v98
    %147 = vmatpush.msra.mxu0 %v96
    %148 = vmatpush.msra.mxu0 %v94
    %149 = vmatpush.msra.mxu0 %v92
    %150 = vmatpush.msra.mxu0 %v90
    %151 = vmatpush.msra.mxu0 %v88
    %152 = vmatpush.msra.mxu0 %v86
    %153 = vmatpush.msra.mxu0 %v84
    %154 = vmatpush.msra.mxu0 %v82
    %155 = vmatmul.f32.gmra.mxu0 %v80
    %v156 = vpop.f32.mrf.mxu0
    %v157 = vadd.f32 %v116, %v156
    %158 = vdwg.mxu0
    %v159 = vtanh.pop %v137
    %v160 = vtanh.pop %v157
    %v161 = vld [vmem:[#allocation8] sm:$0xff]
    %v162 = vld [vmem:[#allocation8 + $0x8] sm:$0xff]
    %v163 = vld [vmem:[#allocation8 + $0x10] sm:$0xff]
    %v164 = vld [vmem:[#allocation8 + $0x18] sm:$0xff]
    %v165 = vld [vmem:[#allocation8 + $0x20] sm:$0xff]
    %v166 = vld [vmem:[#allocation8 + $0x28] sm:$0xff]
    %v167 = vld [vmem:[#allocation8 + $0x30] sm:$0xff]
    %v168 = vld [vmem:[#allocation8 + $0x38] sm:$0xff]
    %v169 = vld [vmem:[#allocation8 + $0x40] sm:$0xff]
    %v170 = vld [vmem:[#allocation8 + $0x48] sm:$0xff]
    %v171 = vld [vmem:[#allocation8 + $0x50] sm:$0xff]
    %v172 = vld [vmem:[#allocation8 + $0x58] sm:$0xff]
    %v173 = vld [vmem:[#allocation8 + $0x60] sm:$0xff]
    %v174 = vld [vmem:[#allocation8 + $0x68] sm:$0xff]
    %v175 = vld [vmem:[#allocation8 + $0x70] sm:$0xff]
    %v176 = vld [vmem:[#allocation8 + $0x78] sm:$0xff]
    %v177 = vld [vmem:[#allocation8 + $0x80] sm:$0xff]
    %v178 = vld [vmem:[#allocation8 + $0x88] sm:$0xff]
    %v179 = vld [vmem:[#allocation8 + $0x90] sm:$0xff]
    %v180 = vld [vmem:[#allocation8 + $0x98] sm:$0xff]
    %v181 = vld [vmem:[#allocation8 + $0xa0] sm:$0xff]
    %v182 = vld [vmem:[#allocation8 + $0xa8] sm:$0xff]
    %v183 = vld [vmem:[#allocation8 + $0xb0] sm:$0xff]
    %v184 = vld [vmem:[#allocation8 + $0xb8] sm:$0xff]
    %v185 = vld [vmem:[#allocation8 + $0xc0] sm:$0xff]
    %v186 = vld [vmem:[#allocation8 + $0xc8] sm:$0xff]
    %v187 = vld [vmem:[#allocation8 + $0xd0] sm:$0xff]
    %v188 = vld [vmem:[#allocation8 + $0xd8] sm:$0xff]
    %v189 = vld [vmem:[#allocation8 + $0xe0] sm:$0xff]
    %v190 = vld [vmem:[#allocation8 + $0xe8] sm:$0xff]
    %v191 = vld [vmem:[#allocation8 + $0xf0] sm:$0xff]
    %v192 = vld [vmem:[#allocation8 + $0xf8] sm:$0xff]
    %v193 = vld [vmem:[%s4] sm:$0x1]
    %194 = vmatpush.msra.mxu0 %v176
    %195 = vmatpush.msra.mxu0 %v175
    %196 = vmatpush.msra.mxu0 %v174
    %197 = vmatpush.msra.mxu0 %v173
    %198 = vmatpush.msra.mxu0 %v172
    %199 = vmatpush.msra.mxu0 %v171
    %200 = vmatpush.msra.mxu0 %v170
    %201 = vmatpush.msra.mxu0 %v169
    %202 = vmatpush.msra.mxu0 %v168
    %203 = vmatpush.msra.mxu0 %v167
    %204 = vmatpush.msra.mxu0 %v166
    %205 = vmatpush.msra.mxu0 %v165
    %206 = vmatpush.msra.mxu0 %v164
    %207 = vmatpush.msra.mxu0 %v163
    %208 = vmatpush.msra.mxu0 %v162
    %209 = vmatpush.msra.mxu0 %v161
    %210 = vmatmul.f32.gmra.mxu0 %v159
    %v211 = vpop.f32.mrf.mxu0
    %v212 = vadd.f32 %v193, %v211
    %213 = vdwg.mxu0
    %214 = vmatpush.msra.mxu0 %v192
    %215 = vmatpush.msra.mxu0 %v191
    %216 = vmatpush.msra.mxu0 %v190
    %217 = vmatpush.msra.mxu0 %v189
    %218 = vmatpush.msra.mxu0 %v188
    %219 = vmatpush.msra.mxu0 %v187
    %220 = vmatpush.msra.mxu0 %v186
    %221 = vmatpush.msra.mxu0 %v185
    %222 = vmatpush.msra.mxu0 %v184
    %223 = vmatpush.msra.mxu0 %v183
    %224 = vmatpush.msra.mxu0 %v182
    %225 = vmatpush.msra.mxu0 %v181
    %226 = vmatpush.msra.mxu0 %v180
    %227 = vmatpush.msra.mxu0 %v179
    %228 = vmatpush.msra.mxu0 %v178
    %229 = vmatpush.msra.mxu0 %v177
    %230 = vmatmul.f32.gmra.mxu0 %v160
    %v231 = vpop.f32.mrf.mxu0
    %v232 = vadd.f32 %v212, %v231
    %233 = vdwg.mxu0
    %v234 = vlaneseq
    %v235 = vand.u32 %v234, 127
    %vm236 = vcmp.lt.s32.totalorder %v235, 0
    %v237 = vsub.s32 0, %v235
    %v238 = vsel %vm236, %v237, %v235
    %v239 = vshrl.u32 %v238, 4
    %v240 = vand.u32 %v238, 15
    %v241 = vsub.s32 0, %v240
    %v242 = vsel %vm236, %v241, %v240
    %vm243 = vcmp.ne.s32.totalorder %v242, 0
    %vm244 = vcmp.lt.s32.totalorder %v242, 0
    %vm245 = vmand %vm244, %vm243
    %v246 = vadd.s32 %v242, 16
    %v247 = vsel %vm245, %v246, %v242
    %vm248 = vcmp.lt.s32.totalorder %v247, 4
    %vm249 = vcmp.ge.s32.totalorder %v247, 8
    %vm250 = vcmp.lt.s32.totalorder %v247, 12
    %vm251 = vmand %vm249, %vm250
    %v252 = vsel %vm248, %v232, -1e+30
    %253 = vrot.lane.b32.xlu0 %v252, 1
    %v254 = vpop.permute.xlu0 %253
    %255 = vrot.lane.b32.xlu0 %v252, 127
    %v256 = vpop.permute.xlu0 %255
    %v257 = vmax.f32 %v254, %v256
    %v258 = vmax.f32 %v252, %v257
    %259 = vrot.lane.b32.xlu0 %v258, 2
    %v260 = vpop.permute.xlu0 %259
    %261 = vrot.lane.b32.xlu0 %v258, 126
    %v262 = vpop.permute.xlu0 %261
    %v263 = vmax.f32 %v260, %v262
    %v264 = vmax.f32 %v258, %v263
    %v265 = vsel %vm248, %v264, 0.0
    %v266 = vsub.f32 %v232, %v265
    %v267 = vmul.f32 %v266, 1.442695
    %v268 = vpow.pop %v267
    %v269 = vsel %vm248, %v268, 0.0
    %270 = vrot.lane.b32.xlu0 %v269, 1
    %v271 = vpop.permute.xlu0 %270
    %v272 = vadd.f32 %v269, %v271
    %273 = vrot.lane.b32.xlu0 %v269, 127
    %v274 = vpop.permute.xlu0 %273
    %v275 = vadd.f32 %v269, %v274
    %276 = vrot.lane.b32.xlu0 %v272, 2
    %v277 = vpop.permute.xlu0 %276
    %v278 = vadd.f32 %v272, %v277
    %279 = vrot.lane.b32.xlu0 %v275, 126
    %v280 = vpop.permute.xlu0 %279
    %v281 = vadd.f32 %v275, %v280
    %v282 = vadd.f32 %v278, %v281
    %v283 = vsub.f32 %v282, %v269
    %v284 = vsel %vm248, %v283, 1.0
    %v285 = vrcp.pop %v284
    %v286 = vmul.f32 %v284, %v285
    %v287 = vsub.f32 1.0, %v286
    %v288 = vmul.f32 %v285, %v287
    %v289 = vadd.f32 %v285, %v288
    %vm290 = vweird.f32 %v284
    %vm291 = vweird.f32 %v285
    %vm292 = vmor %vm290, %vm291
    %v293 = vsel %vm292, %v285, %v289
    %v294 = vand.u32 2147483647, %v284
    %vm295 = vcmp.eq.f32.partialorder %v294, 8.507059e+37
    %v296 = vand.u32 %v284, 2147483648
    %v297 = vor.u32 1.1754944e-38, %v296
    %v298 = vsel %vm295, %v297, %v293
    %v299 = vmul.f32 %v269, %v298
    %v300 = vsel %vm251, %v268, %v232
    %v301 = vsel %vm248, %v299, %v300
    %302 = vst [vmem:[#allocation10] sm:$0x1] %v301
    // Predicated region
    $region38: #{tpu_custom_call.1} parent=1 // pred_check
      _
    $region39: #{tpu_custom_call.1} parent=1 // pred_check_branch
      %304 = sbr.rel (0) target = $region41
    $region40: #{tpu_custom_call.1} parent=1 // pred_region
      %306 = vsyncadd [#allocation4], 0
      %s308 = sshll.u32 [#allocation10], 4
      %s309 = int_to_ptr.vmem [resolvable:$true] %s308
      %s310 = sshll.u32 %s5, 4
      %s311 = int_to_ptr.hbm [resolvable:$true] %s310
      %313 = dma.vmem_to_hbm [thread:$0]  %s309, 16, %s311, [#allocation4]
    $region41: #{tpu_custom_call.1} parent=1 // pred_fallthru
      _
    // Predicated region
    $region42: #{tpu_custom_call.1} parent=1 // pred_check
      _
    $region43: #{tpu_custom_call.1} parent=1 // pred_check_branch
      %315 = sbr.rel (0) target = $region45
    $region44: #{tpu_custom_call.1} parent=1 // pred_region
      %317 = dma.done [#allocation4], 16
    $region45: #{tpu_custom_call.1} parent=1 // pred_fallthru
      _
    %318 = vsyncpa [#allocation3], 1
    %319 = vsyncpa [#allocation6], 1
    %320 = vsyncpa [#allocation9], 1
    %321 = vsyncpa [#allocation4], 1

</llo_original>
